<compile_context>
chip_gen: v7x
topology: tpu7x:2x2x1
jax: 0.10.0
libtpu: 0.0.40
codegen_flags: <defaults>
</compile_context>

<pallas_src>
import functools

import jax
import jax.numpy as jnp
from jax.experimental import pallas as pl
from jax.experimental.pallas import tpu as pltpu


def _round_up(n, m):
    return ((n + m - 1) // m) * m


def _alw_att_kernel(x_ref, wbig_ref, bbig_ref, b1_ref, w2_t_ref, b2_ref,
                    out_ref, att_ref, *, K, K_pad, H):
    x = x_ref[...]                                                   # (TB, D)

    # --- single fused MXU matmul: [ att logits | h_self | h_chunk_0..K-1 ] ---
    p = jnp.dot(x, wbig_ref[...],
                preferred_element_type=jnp.float32) + bbig_ref[...]  # (TB, W)

    # --- softmax over dim=1 (padded logit cols carry a -1e30 bias -> exp==0) ---
    logits = p[:, :K_pad]
    m = jnp.max(logits, axis=1, keepdims=True)
    e = jnp.exp(logits - m)
    att = e * pl.reciprocal(jnp.sum(e, axis=1, keepdims=True), approx=False)

    # --- h_lin = h_self + sum_k att[:, k] * h_chunk_k  (tiny VPU weighted sum) ---
    h_lin = p[:, K_pad:K_pad + H]
    for k in range(K):
        c0 = K_pad + H + k * H
        h_lin = h_lin + att[:, k:k + 1] * p[:, c0:c0 + H]

    # --- output MLP tail ---
    h = jnp.maximum(h_lin + b1_ref[...], 0.0)
    out = jnp.dot(h, w2_t_ref[...],
                  preferred_element_type=jnp.float32) + b2_ref[...]

    # two direct stores (no lane concat / relayout)
    out_ref[...] = out
    att_ref[...] = att[:, :K]


def prepare_alw_att_params(params, agent_num, obs_dim):
    """One-time weight preparation (hoisted out of the per-call path)."""
    K = agent_num * 3 - 1
    K_pad = _round_up(K, 8)
    other_width = 28 * K
    assert obs_dim == 36 + other_width

    w_att, b_att = params["w_att"], params["b_att"]     # (K, D), (K,)
    w1, b1 = params["w1"], params["b1"]                 # (H, D), (H,)
    w2, b2 = params["w2"], params["b2"]                 # (O, H), (O,)
    H = w1.shape[0]
    D = obs_dim

    # Fused projection Wbig : (D, K_pad + H + K*H)
    #   cols [0 : K_pad]                     -> attention logits (padded cols zero)
    #   cols [K_pad : K_pad+H]               -> h_self   = x[:, :36]           @ W1[:, 28K:].T
    #   cols [K_pad+H+k*H : K_pad+H+(k+1)*H] -> h_chunk_k = x[:, 36+28k:36+28(k+1)] @ W1[:, 28k:28(k+1)].T
    W_total = K_pad + H + K * H
    Wbig = jnp.zeros((D, W_total), jnp.float32)
    Wbig = Wbig.at[:, :K].set(jnp.asarray(w_att, jnp.float32).T)
    Wbig = Wbig.at[:36, K_pad:K_pad + H].set(
        jnp.asarray(w1[:, other_width:], jnp.float32).T)
    for k in range(K):
        r0 = 36 + 28 * k
        c0 = K_pad + H + k * H
        Wbig = Wbig.at[r0:r0 + 28, c0:c0 + H].set(
            jnp.asarray(w1[:, 28 * k:28 * (k + 1)], jnp.float32).T)

    # bias: real attention biases, -1e30 on padded logit columns (softmax -> 0),
    # zeros on the h-projection columns (b1 is added after the weighted sum).
    bbig = jnp.zeros((1, W_total), jnp.float32)
    bbig = bbig.at[0, :K_pad].set(-1e30)
    bbig = bbig.at[0, :K].set(jnp.asarray(b_att, jnp.float32))

    return {
        "Wbig": Wbig,                               # (D, K_pad + H + K*H)
        "bbig": bbig,                               # (1, K_pad + H + K*H)
        "b1": jnp.asarray(b1, jnp.float32)[None, :],    # (1, H)
        "w2_t": jnp.asarray(w2, jnp.float32).T,         # (H, O)
        "b2": jnp.asarray(b2, jnp.float32)[None, :],    # (1, O)
    }


def alw_att_net_forward(x, prep, agent_num):
    """Batch-gridded Pallas forward. Returns (out, att) like the PyTorch module."""
    B, obs_dim = x.shape
    K = agent_num * 3 - 1
    H = prep["w2_t"].shape[0]
    out_dim = prep["w2_t"].shape[1]
    K_pad = prep["bbig"].shape[1] - H - K * H

    # --- batch tiling: sublane-friendly, VMEM-safe, >=2 tiles for v7x megacore ---
    TB_CAP = 4096                          # keeps double-buffered tiles well inside v7x VMEM
    B8 = _round_up(B, 8)
    n_tiles = max(1, pl.cdiv(B8, TB_CAP))
    if B8 > 512:
        n_tiles = max(n_tiles, 2)          # feed both v7x TensorCores
    if B % 8 == 0:
        # prefer a tile count whose 8-aligned tiles cover B exactly
        # (avoids materializing a padded copy of x in HBM)
        for cand in range(n_tiles, min(n_tiles + 8, B // 8) + 1):
            if (B // 8) % cand == 0:
                n_tiles = cand
                break
    TB = _round_up(pl.cdiv(B8, n_tiles), 8)
    n_tiles = pl.cdiv(B8, TB)
    B_pad = n_tiles * TB
    if B_pad != B:
        # fallback only for ragged batches that 8-aligned tiles cannot cover exactly
        x = jnp.pad(x, ((0, B_pad - B), (0, 0)))

    def full_spec(a):
        # weights/biases: whole array resident in VMEM (constant block index).
        return pl.BlockSpec(a.shape, lambda i, nd=a.ndim: (0,) * nd)

    kernel = functools.partial(_alw_att_kernel, K=K, K_pad=K_pad, H=H)

    out_p, att_p = pl.pallas_call(
        kernel,
        out_shape=(jax.ShapeDtypeStruct((B_pad, out_dim), jnp.float32),
                   jax.ShapeDtypeStruct((B_pad, K), jnp.float32)),
        grid=(n_tiles,),
        in_specs=[
            pl.BlockSpec((TB, obs_dim), lambda i: (i, 0)),   # x: batch-tiled
            full_spec(prep["Wbig"]),
            full_spec(prep["bbig"]),
            full_spec(prep["b1"]),
            full_spec(prep["w2_t"]),
            full_spec(prep["b2"]),
        ],
        out_specs=[
            pl.BlockSpec((TB, out_dim), lambda i: (i, 0)),
            pl.BlockSpec((TB, K), lambda i: (i, 0)),
        ],
        compiler_params=pltpu.CompilerParams(
            dimension_semantics=("parallel",),               # megacore split on v7x
            vmem_limit_bytes=48 * 1024 * 1024,
        ),
    )(
        x,
        prep["Wbig"], prep["bbig"], prep["b1"], prep["w2_t"], prep["b2"],
    )

    if B_pad != B:
        out_p = out_p[:B]
        att_p = att_p[:B]
    return out_p, att_p


def _reference_forward(x, params, agent_num):
    """Pure-JAX transcription of the PyTorch forward, for verification."""
    K = agent_num * 3 - 1
    logits = x @ params["w_att"].T + params["b_att"]
    att = jax.nn.softmax(logits, axis=1)
    self_info = x[:, 0:36]
    other_info = x[:, 36:]
    B = x.shape[0]
    agents_info = other_info.reshape(B, K, 28)   # == stack(split(28)).permute(1,0,2)
    other_we = (att[:, :, None] * agents_info).reshape(B, -1)
    emb = jnp.concatenate([other_we, self_info], axis=1)
    h = jnp.maximum(emb @ params["w1"].T + params["b1"], 0.0)
    out = h @ params["w2"].T + params["b2"]
    return out, att


def _init_params(key, obs_dim, output_dim, hidden_dim, agent_num):
    """Deterministic init mimicking nn.Linear's uniform(-1/sqrt(fan_in), +)."""
    K = agent_num * 3 - 1
    ks = jax.random.split(key, 6)

    def lin(kw, kb, fan_out, fan_in):
        bound = 1.0 / jnp.sqrt(float(fan_in))
        w = jax.random.uniform(kw, (fan_out, fan_in), jnp.float32, -bound, bound)
        b = jax.random.uniform(kb, (fan_out,), jnp.float32, -bound, bound)
        return w, b

    w_att, b_att = lin(ks[0], ks[1], K, obs_dim)
    w1, b1 = lin(ks[2], ks[3], hidden_dim, obs_dim)
    w2, b2 = lin(ks[4], ks[5], output_dim, hidden_dim)
    return {"w_att": w_att, "b_att": b_att,
            "w1": w1, "b1": b1, "w2": w2, "b2": b2}


if __name__ == "__main__":
    # Small shapes consistent with the forward's structure:
    # obs_dim = 36 + 28 * (3*agent_num - 1)
    agent_num = 2
    K = agent_num * 3 - 1            # 5
    obs_dim = 36 + 28 * K            # 176
    hidden_dim = 32
    output_dim = 8
    batch = 8

    key = jax.random.PRNGKey(0)
    k_x, k_p = jax.random.split(key)
    x = jax.random.normal(k_x, (batch, obs_dim), dtype=jnp.float32)
    params = _init_params(k_p, obs_dim, output_dim, hidden_dim, agent_num)

    # One-time weight preparation, hoisted out of the per-call path.
    prep = prepare_alw_att_params(params, agent_num, obs_dim)
    prep = jax.block_until_ready(prep)

    fwd = jax.jit(functools.partial(alw_att_net_forward, agent_num=agent_num))
    out, att = fwd(x, prep)
    jax.block_until_ready((out, att))

    ref_out, ref_att = _reference_forward(x, params, agent_num)
    assert out.shape == (batch, output_dim) and att.shape == (batch, K)
    assert jnp.allclose(out, ref_out, atol=1e-5, rtol=1e-5)
    assert jnp.allclose(att, ref_att, atol=1e-5, rtol=1e-5)

    print("KERNEL_OK")
</pallas_src>

<mosaic_0001>
module attributes {stable_mosaic.version = 11 : i64} {
  func.func @_alw_att_kernel(%arg0: i32, %arg1: memref<8x176xf32, #tpu.memory_space<vmem>>, %arg2: memref<176x200xf32, #tpu.memory_space<vmem>>, %arg3: memref<1x200xf32, #tpu.memory_space<vmem>>, %arg4: memref<1x32xf32, #tpu.memory_space<vmem>>, %arg5: memref<32x8xf32, #tpu.memory_space<vmem>>, %arg6: memref<1x8xf32, #tpu.memory_space<vmem>>, %arg7: memref<8x8xf32, #tpu.memory_space<vmem>>, %arg8: memref<8x5xf32, #tpu.memory_space<vmem>>) attributes {dimension_semantics = [#tpu.dimension_semantics<parallel>], iteration_bounds = array<i64: 1>, scalar_prefetch = 0 : i64, scratch_operands = 0 : i64, tpu.core_type = #tpu.core_type<tc>, window_params = [{transform_indices = @transform_0, window_bounds = array<i64: 8, 176>}, {pipeline_mode = #tpu.pipeline_mode<synchronous>, transform_indices = @transform_1, window_bounds = array<i64: 176, 200>}, {pipeline_mode = #tpu.pipeline_mode<synchronous>, transform_indices = @transform_2, window_bounds = array<i64: 1, 200>}, {pipeline_mode = #tpu.pipeline_mode<synchronous>, transform_indices = @transform_3, window_bounds = array<i64: 1, 32>}, {pipeline_mode = #tpu.pipeline_mode<synchronous>, transform_indices = @transform_4, window_bounds = array<i64: 32, 8>}, {pipeline_mode = #tpu.pipeline_mode<synchronous>, transform_indices = @transform_5, window_bounds = array<i64: 1, 8>}, {transform_indices = @transform_6, window_bounds = array<i64: 8, 8>}, {transform_indices = @transform_7, window_bounds = array<i64: 8, 5>}]} {
    %c0 = arith.constant 0 : index
    %c0_0 = arith.constant 0 : index
    %0 = vector.load %arg1[%c0, %c0_0] : memref<8x176xf32, #tpu.memory_space<vmem>>, vector<8x176xf32>
    %c0_1 = arith.constant 0 : index
    %c0_2 = arith.constant 0 : index
    %1 = vector.load %arg2[%c0_1, %c0_2] : memref<176x200xf32, #tpu.memory_space<vmem>>, vector<176x200xf32>
    %cst = arith.constant dense<0.000000e+00> : vector<8x200xf32>
    %2 = tpu.matmul %0, %1, %cst {dimension_numbers = #tpu.dot_dimension_numbers<[1], [0], [0], [1], [0, 0, 1, 1], [], []>} : vector<8x176xf32>, vector<176x200xf32>, vector<8x200xf32> -> vector<8x200xf32>
    %c0_3 = arith.constant 0 : index
    %c0_4 = arith.constant 0 : index
    %3 = vector.load %arg3[%c0_3, %c0_4] : memref<1x200xf32, #tpu.memory_space<vmem>>, vector<1x200xf32>
    %4 = vector.broadcast %3 : vector<1x200xf32> to vector<8x200xf32>
    %5 = arith.addf %2, %4 : vector<8x200xf32>
    %6 = vector.extract_strided_slice %5 {offsets = [0, 0], sizes = [8, 8], strides = [1, 1]} : vector<8x200xf32> to vector<8x8xf32>
    %cst_5 = arith.constant dense<0xFF800000> : vector<8xf32>
    %7 = vector.multi_reduction <maximumf>, %6, %cst_5 [1] : vector<8x8xf32> to vector<8xf32>
    %8 = vector.shape_cast %7 : vector<8xf32> to vector<8x1xf32>
    %9 = vector.broadcast %8 : vector<8x1xf32> to vector<8x8xf32>
    %10 = arith.subf %6, %9 : vector<8x8xf32>
    %11 = math.exp %10 : vector<8x8xf32>
    %cst_6 = arith.constant dense<0.000000e+00> : vector<8xf32>
    %12 = vector.multi_reduction <add>, %11, %cst_6 [1] : vector<8x8xf32> to vector<8xf32>
    %13 = vector.shape_cast %12 : vector<8xf32> to vector<8x1xf32>
    %14 = tpu.reciprocal %13 : vector<8x1xf32> -> vector<8x1xf32>
    %15 = vector.broadcast %14 : vector<8x1xf32> to vector<8x8xf32>
    %16 = arith.mulf %11, %15 : vector<8x8xf32>
    %17 = vector.extract_strided_slice %5 {offsets = [0, 8], sizes = [8, 32], strides = [1, 1]} : vector<8x200xf32> to vector<8x32xf32>
    %18 = vector.extract_strided_slice %16 {offsets = [0, 0], sizes = [8, 1], strides = [1, 1]} : vector<8x8xf32> to vector<8x1xf32>
    %19 = vector.extract_strided_slice %5 {offsets = [0, 40], sizes = [8, 32], strides = [1, 1]} : vector<8x200xf32> to vector<8x32xf32>
    %20 = vector.broadcast %18 : vector<8x1xf32> to vector<8x32xf32>
    %21 = arith.mulf %20, %19 : vector<8x32xf32>
    %22 = arith.addf %17, %21 : vector<8x32xf32>
    %23 = vector.extract_strided_slice %16 {offsets = [0, 1], sizes = [8, 1], strides = [1, 1]} : vector<8x8xf32> to vector<8x1xf32>
    %24 = vector.extract_strided_slice %5 {offsets = [0, 72], sizes = [8, 32], strides = [1, 1]} : vector<8x200xf32> to vector<8x32xf32>
    %25 = vector.broadcast %23 : vector<8x1xf32> to vector<8x32xf32>
    %26 = arith.mulf %25, %24 : vector<8x32xf32>
    %27 = arith.addf %22, %26 : vector<8x32xf32>
    %28 = vector.extract_strided_slice %16 {offsets = [0, 2], sizes = [8, 1], strides = [1, 1]} : vector<8x8xf32> to vector<8x1xf32>
    %29 = vector.extract_strided_slice %5 {offsets = [0, 104], sizes = [8, 32], strides = [1, 1]} : vector<8x200xf32> to vector<8x32xf32>
    %30 = vector.broadcast %28 : vector<8x1xf32> to vector<8x32xf32>
    %31 = arith.mulf %30, %29 : vector<8x32xf32>
    %32 = arith.addf %27, %31 : vector<8x32xf32>
    %33 = vector.extract_strided_slice %16 {offsets = [0, 3], sizes = [8, 1], strides = [1, 1]} : vector<8x8xf32> to vector<8x1xf32>
    %34 = vector.extract_strided_slice %5 {offsets = [0, 136], sizes = [8, 32], strides = [1, 1]} : vector<8x200xf32> to vector<8x32xf32>
    %35 = vector.broadcast %33 : vector<8x1xf32> to vector<8x32xf32>
    %36 = arith.mulf %35, %34 : vector<8x32xf32>
    %37 = arith.addf %32, %36 : vector<8x32xf32>
    %38 = vector.extract_strided_slice %16 {offsets = [0, 4], sizes = [8, 1], strides = [1, 1]} : vector<8x8xf32> to vector<8x1xf32>
    %39 = vector.extract_strided_slice %5 {offsets = [0, 168], sizes = [8, 32], strides = [1, 1]} : vector<8x200xf32> to vector<8x32xf32>
    %40 = vector.broadcast %38 : vector<8x1xf32> to vector<8x32xf32>
    %41 = arith.mulf %40, %39 : vector<8x32xf32>
    %42 = arith.addf %37, %41 : vector<8x32xf32>
    %c0_7 = arith.constant 0 : index
    %c0_8 = arith.constant 0 : index
    %43 = vector.load %arg4[%c0_7, %c0_8] : memref<1x32xf32, #tpu.memory_space<vmem>>, vector<1x32xf32>
    %44 = vector.broadcast %43 : vector<1x32xf32> to vector<8x32xf32>
    %45 = arith.addf %42, %44 : vector<8x32xf32>
    %cst_9 = arith.constant 0.000000e+00 : f32
    %46 = vector.broadcast %cst_9 : f32 to vector<8x32xf32>
    %47 = arith.maximumf %45, %46 : vector<8x32xf32>
    %c0_10 = arith.constant 0 : index
    %c0_11 = arith.constant 0 : index
    %48 = vector.load %arg5[%c0_10, %c0_11] : memref<32x8xf32, #tpu.memory_space<vmem>>, vector<32x8xf32>
    %cst_12 = arith.constant dense<0.000000e+00> : vector<8x8xf32>
    %49 = tpu.matmul %47, %48, %cst_12 {dimension_numbers = #tpu.dot_dimension_numbers<[1], [0], [0], [1], [0, 0, 1, 1], [], []>} : vector<8x32xf32>, vector<32x8xf32>, vector<8x8xf32> -> vector<8x8xf32>
    %c0_13 = arith.constant 0 : index
    %c0_14 = arith.constant 0 : index
    %50 = vector.load %arg6[%c0_13, %c0_14] : memref<1x8xf32, #tpu.memory_space<vmem>>, vector<1x8xf32>
    %51 = vector.broadcast %50 : vector<1x8xf32> to vector<8x8xf32>
    %52 = arith.addf %49, %51 : vector<8x8xf32>
    %c0_15 = arith.constant 0 : index
    %c0_16 = arith.constant 0 : index
    %53 = vector.load %arg7[%c0_15, %c0_16] : memref<8x8xf32, #tpu.memory_space<vmem>>, vector<8x8xf32>
    tpu.vector_store %arg7[%c0_15, %c0_16], %52 {strides = array<i32>} : memref<8x8xf32, #tpu.memory_space<vmem>>, vector<8x8xf32>,
    %54 = vector.extract_strided_slice %16 {offsets = [0, 0], sizes = [8, 5], strides = [1, 1]} : vector<8x8xf32> to vector<8x5xf32>
    %c0_17 = arith.constant 0 : index
    %c0_18 = arith.constant 0 : index
    %55 = vector.load %arg8[%c0_17, %c0_18] : memref<8x5xf32, #tpu.memory_space<vmem>>, vector<8x5xf32>
    tpu.vector_store %arg8[%c0_17, %c0_18], %54 {strides = array<i32>} : memref<8x5xf32, #tpu.memory_space<vmem>>, vector<8x5xf32>,
    return
  }
  func.func @transform_0(%arg0: i32) -> (i32, i32) {
    %c0_i32 = arith.constant 0 : i32
    %c0_i32_0 = arith.constant 0 : i32
    return %arg0, %c0_i32 : i32, i32
  }
  func.func @transform_1(%arg0: i32) -> (i32, i32) {
    %c0_i32 = arith.constant 0 : i32
    %c0_i32_0 = arith.constant 0 : i32
    %c0_i32_1 = arith.constant 0 : i32
    return %c0_i32, %c0_i32_0 : i32, i32
  }
  func.func @transform_2(%arg0: i32) -> (i32, i32) {
    %c0_i32 = arith.constant 0 : i32
    %c0_i32_0 = arith.constant 0 : i32
    %c0_i32_1 = arith.constant 0 : i32
    return %c0_i32, %c0_i32_0 : i32, i32
  }
  func.func @transform_3(%arg0: i32) -> (i32, i32) {
    %c0_i32 = arith.constant 0 : i32
    %c0_i32_0 = arith.constant 0 : i32
    %c0_i32_1 = arith.constant 0 : i32
    return %c0_i32, %c0_i32_0 : i32, i32
  }
  func.func @transform_4(%arg0: i32) -> (i32, i32) {
    %c0_i32 = arith.constant 0 : i32
    %c0_i32_0 = arith.constant 0 : i32
    %c0_i32_1 = arith.constant 0 : i32
    return %c0_i32, %c0_i32_0 : i32, i32
  }
  func.func @transform_5(%arg0: i32) -> (i32, i32) {
    %c0_i32 = arith.constant 0 : i32
    %c0_i32_0 = arith.constant 0 : i32
    %c0_i32_1 = arith.constant 0 : i32
    return %c0_i32, %c0_i32_0 : i32, i32
  }
  func.func @transform_6(%arg0: i32) -> (i32, i32) {
    %c0_i32 = arith.constant 0 : i32
    %c0_i32_0 = arith.constant 0 : i32
    return %arg0, %c0_i32 : i32, i32
  }
  func.func @transform_7(%arg0: i32) -> (i32, i32) {
    %c0_i32 = arith.constant 0 : i32
    %c0_i32_0 = arith.constant 0 : i32
    return %arg0, %c0_i32 : i32, i32
  }
}

</mosaic_0001>

<llo_original>
// kernel: alw_att_net_forward.1
$region0: #{alw_att_net_forward.1}
  #allocation0 [shape = 'u32[]', space=smem, size = 0x4, offset = 0x4, fixed_abs, tag = 'smem constant byte address 0x4 - core index']
  #allocation1 [shape = 'u32[144,128]{1,0:T(1,128)}', space=vmem, size = 0x12000, scoped, tag = 'internal scratch']
  %s0 = inlined_call_operand.vmem [shape: f32[8,176], index: 0, kind: input, shape index: {}]
  %s1 = inlined_call_operand.hbm [shape: f32[176,200], index: 1, kind: input, shape index: {}]
  %s2 = inlined_call_operand.vmem [shape: f32[1,200], index: 2, kind: input, shape index: {}]
  %s3 = inlined_call_operand.vmem [shape: f32[1,32], index: 3, kind: input, shape index: {}]
  %s4 = inlined_call_operand.vmem [shape: f32[32,8], index: 4, kind: input, shape index: {}]
  %s5 = inlined_call_operand.vmem [shape: f32[1,8], index: 5, kind: input, shape index: {}]
  %s6 = inlined_call_operand.hbm [shape: f32[8,8], index: 6, kind: output, shape index: {0}]
  %s7 = inlined_call_operand.hbm [shape: f32[8,5], index: 7, kind: output, shape index: {1}]
  %8 = xla_tuple %s6, %s7
  %s9 = sld [smem:[#allocation0]]
  $region46: #{alw_att_net_forward.1} parent=0
    _
  %s11 = ssub.s32 1, %s9
  %s12 = scalar_select 0, %s11, %s9
  $region1: #{alw_att_net_forward.1} parent=0
    #allocation2 [shape = 'u8[180224]{0}', space=vmem, size = 0x2c000, scoped, tag = 'input window, operand 1, single buffered']
    #allocation3 [shape = 's32[1]{0}', space=sflag, size = 0x4, scoped, tag = 'scoped memory for alw_att_net_forward.1']
    #allocation4 [shape = 's32[1]{0}', space=sflag, size = 0x4, scoped, tag = 'scoped memory for alw_att_net_forward.1']
    #allocation5 [shape = 'u8[4096]{0}', space=vmem, size = 0x1000, scoped, tag = 'output window, operand 0, single buffered']
    #allocation6 [shape = 'u8[4096]{0}', space=vmem, size = 0x1000, scoped, tag = 'output window, operand 1, single buffered']
    #allocation7 [shape = 's32[1]{0}', space=sflag, size = 0x4, scoped, tag = 'scoped memory for alw_att_net_forward.1']
    %13 = vsyncpa [#allocation3], 0
    %14 = vsyncpa [#allocation4], 0
    %15 = vsyncpa [#allocation7], 0
    // Predicated region
    $region2: #{alw_att_net_forward.1} parent=1 // pred_check
      _
    $region3: #{alw_att_net_forward.1} parent=1 // pred_check_branch
      %17 = sbr.rel (0) target = $region5
    $region4: #{alw_att_net_forward.1} parent=1 // pred_region
      _
    $region5: #{alw_att_net_forward.1} parent=1 // pred_fallthru
      _
    // Predicated region
    $region6: #{alw_att_net_forward.1} parent=1 // pred_check
      _
    $region7: #{alw_att_net_forward.1} parent=1 // pred_check_branch
      %19 = sbr.rel (0) target = $region9
    $region8: #{alw_att_net_forward.1} parent=1 // pred_region
      %s21 = ssub.s32 5632, 5632
      %22 = vsyncadd [#allocation3], %s21
      %s23 = sshll.u32 [#allocation2], 4
      %s24 = int_to_ptr.vmem [resolvable:$true] %s23
      %29 = dma.hbm_to_vmem [thread:$0]  %s1, 5632, %s24, [#allocation3], 256, 256, 16
    $region9: #{alw_att_net_forward.1} parent=1 // pred_fallthru
      _
    // Predicated region
    $region10: #{alw_att_net_forward.1} parent=1 // pred_check
      _
    $region11: #{alw_att_net_forward.1} parent=1 // pred_check_branch
      %31 = sbr.rel (0) target = $region13
    $region12: #{alw_att_net_forward.1} parent=1 // pred_region
      _
    $region13: #{alw_att_net_forward.1} parent=1 // pred_fallthru
      _
    // Predicated region
    $region14: #{alw_att_net_forward.1} parent=1 // pred_check
      _
    $region15: #{alw_att_net_forward.1} parent=1 // pred_check_branch
      %33 = sbr.rel (0) target = $region17
    $region16: #{alw_att_net_forward.1} parent=1 // pred_region
      _
    $region17: #{alw_att_net_forward.1} parent=1 // pred_fallthru
      _
    // Predicated region
    $region18: #{alw_att_net_forward.1} parent=1 // pred_check
      _
    $region19: #{alw_att_net_forward.1} parent=1 // pred_check_branch
      %35 = sbr.rel (0) target = $region21
    $region20: #{alw_att_net_forward.1} parent=1 // pred_region
      _
    $region21: #{alw_att_net_forward.1} parent=1 // pred_fallthru
      _
    // Predicated region
    $region22: #{alw_att_net_forward.1} parent=1 // pred_check
      _
    $region23: #{alw_att_net_forward.1} parent=1 // pred_check_branch
      %37 = sbr.rel (0) target = $region25
    $region24: #{alw_att_net_forward.1} parent=1 // pred_region
      _
    $region25: #{alw_att_net_forward.1} parent=1 // pred_fallthru
      _
    // Predicated region
    $region26: #{alw_att_net_forward.1} parent=1 // pred_check
      _
    $region27: #{alw_att_net_forward.1} parent=1 // pred_check_branch
      %39 = sbr.rel (0) target = $region29
    $region28: #{alw_att_net_forward.1} parent=1 // pred_region
      %40 = dma.done [#allocation3], 5632
    $region29: #{alw_att_net_forward.1} parent=1 // pred_fallthru
      _
    %v41 = vld [vmem:[%s0] sm:$0xff]
    %v42 = vld [vmem:[%s0 + $0x8] sm:$0xff]
    %v43 = vld [vmem:[#allocation2] sm:$0xff]
    %v44 = vld [vmem:[#allocation2 + $0x8] sm:$0xff]
    %v45 = vld [vmem:[#allocation2 + $0x10] sm:$0xff]
    %v46 = vld [vmem:[#allocation2 + $0x18] sm:$0xff]
    %v47 = vld [vmem:[#allocation2 + $0x20] sm:$0xff]
    %v48 = vld [vmem:[#allocation2 + $0x28] sm:$0xff]
    %v49 = vld [vmem:[#allocation2 + $0x30] sm:$0xff]
    %v50 = vld [vmem:[#allocation2 + $0x38] sm:$0xff]
    %v51 = vld [vmem:[#allocation2 + $0x40] sm:$0xff]
    %v52 = vld [vmem:[#allocation2 + $0x48] sm:$0xff]
    %v53 = vld [vmem:[#allocation2 + $0x50] sm:$0xff]
    %v54 = vld [vmem:[#allocation2 + $0x58] sm:$0xff]
    %v55 = vld [vmem:[#allocation2 + $0x60] sm:$0xff]
    %v56 = vld [vmem:[#allocation2 + $0x68] sm:$0xff]
    %v57 = vld [vmem:[#allocation2 + $0x70] sm:$0xff]
    %v58 = vld [vmem:[#allocation2 + $0x78] sm:$0xff]
    %v59 = vld [vmem:[#allocation2 + $0x80] sm:$0xff]
    %v60 = vld [vmem:[#allocation2 + $0x88] sm:$0xff]
    %v61 = vld [vmem:[#allocation2 + $0x90] sm:$0xff]
    %v62 = vld [vmem:[#allocation2 + $0x98] sm:$0xff]
    %v63 = vld [vmem:[#allocation2 + $0xa0] sm:$0xff]
    %v64 = vld [vmem:[#allocation2 + $0xa8] sm:$0xff]
    %v65 = vld [vmem:[#allocation2 + $0xb0] sm:$0xff]
    %v66 = vld [vmem:[#allocation2 + $0xb8] sm:$0xff]
    %v67 = vld [vmem:[#allocation2 + $0xc0] sm:$0xff]
    %v68 = vld [vmem:[#allocation2 + $0xc8] sm:$0xff]
    %v69 = vld [vmem:[#allocation2 + $0xd0] sm:$0xff]
    %v70 = vld [vmem:[#allocation2 + $0xd8] sm:$0xff]
    %v71 = vld [vmem:[#allocation2 + $0xe0] sm:$0xff]
    %v72 = vld [vmem:[#allocation2 + $0xe8] sm:$0xff]
    %v73 = vld [vmem:[#allocation2 + $0xf0] sm:$0xff]
    %v74 = vld [vmem:[#allocation2 + $0xf8] sm:$0xff]
    %v75 = vld [vmem:[#allocation2 + $0x100] sm:$0xff]
    %v76 = vld [vmem:[#allocation2 + $0x108] sm:$0xff]
    %v77 = vld [vmem:[#allocation2 + $0x110] sm:$0xff]
    %v78 = vld [vmem:[#allocation2 + $0x118] sm:$0xff]
    %v79 = vld [vmem:[#allocation2 + $0x120] sm:$0xff]
    %v80 = vld [vmem:[#allocation2 + $0x128] sm:$0xff]
    %v81 = vld [vmem:[#allocation2 + $0x130] sm:$0xff]
    %v82 = vld [vmem:[#allocation2 + $0x138] sm:$0xff]
    %v83 = vld [vmem:[#allocation2 + $0x140] sm:$0xff]
    %v84 = vld [vmem:[#allocation2 + $0x148] sm:$0xff]
    %v85 = vld [vmem:[#allocation2 + $0x150] sm:$0xff]
    %v86 = vld [vmem:[#allocation2 + $0x158] sm:$0xff]
    %v87 = vld [vmem:[%s2] sm:$0x3]
    %v89 = vlaneseq
    %v90 = vshrl.u32 %v89, 7
    %v91 = vsub.s32 0, %v90
    %v92 = vrot.slane %v87, %v91
    %v93 = vlaneseq
    %v94 = vshrl.u32 %v93, 7
    %v95 = vsub.s32 1, %v94
    %v96 = vrot.slane %v87, %v95
    %vm99 = vcmask 392192
    %v101 = vsel %vm99, %v42, 0
    %103 = vmatprep.subr.mxu0 %v44
    %104 = vmatpush1.msra.mxu0 %v43
    %105 = vmatprep.subr.mxu0 %v46
    %106 = vmatpush1.msra.mxu0 %v45
    %107 = vmatprep.subr.mxu0 %v48
    %108 = vmatpush1.msra.mxu0 %v47
    %109 = vmatprep.subr.mxu0 %v50
    %110 = vmatpush1.msra.mxu0 %v49
    %111 = vmatprep.subr.mxu0 %v52
    %112 = vmatpush1.msra.mxu0 %v51
    %113 = vmatprep.subr.mxu0 %v54
    %114 = vmatpush1.msra.mxu0 %v53
    %115 = vmatprep.subr.mxu0 %v56
    %116 = vmatpush1.msra.mxu0 %v55
    %117 = vmatprep.subr.mxu0 %v58
    %118 = vmatpush1.msra.mxu0 %v57
    %119 = vmatprep.subr.mxu0 %v60
    %120 = vmatpush1.msra.mxu0 %v59
    %121 = vmatprep.subr.mxu0 %v62
    %122 = vmatpush1.msra.mxu0 %v61
    %123 = vmatprep.subr.mxu0 %v64
    %124 = vmatpush1.msra.mxu0 %v63
    %125 = vmatprep.subr.mxu0 %v66
    %126 = vmatpush1.msra.mxu0 %v65
    %127 = vmatprep.subr.mxu0 %v68
    %128 = vmatpush1.msra.mxu0 %v67
    %129 = vmatprep.subr.mxu0 %v70
    %130 = vmatpush1.msra.mxu0 %v69
    %131 = vmatprep.subr.mxu0 %v72
    %132 = vmatpush1.msra.mxu0 %v71
    %133 = vmatprep.subr.mxu0 %v74
    %134 = vmatpush1.msra.mxu0 %v73
    %135 = vmatprep.subr.mxu0 %v76
    %136 = vmatpush1.msra.mxu0 %v75
    %137 = vmatprep.subr.mxu0 %v78
    %138 = vmatpush1.msra.mxu0 %v77
    %139 = vmatprep.subr.mxu0 %v80
    %140 = vmatpush1.msra.mxu0 %v79
    %141 = vmatprep.subr.mxu0 %v82
    %142 = vmatpush1.msra.mxu0 %v81
    %143 = vmatprep.subr.mxu0 %v84
    %144 = vmatpush1.msra.mxu0 %v83
    %145 = vmatprep.subr.mxu0 %v86
    %146 = vmatpush1.msra.mxu0 %v85
    %147 = vmatprep.subr.mxu0 0.0
    %148 = vmatpush1.msra.mxu0 0.0
    %149 = vmatprep.subr.mxu0 0.0
    %150 = vmatpush1.msra.mxu0 0.0
    %151 = vmatprep.subr.mxu0 0.0
    %152 = vmatpush1.msra.mxu0 0.0
    %153 = vmatprep.subr.mxu0 0.0
    %154 = vmatpush1.msra.mxu0 0.0
    %155 = vmatprep.subr.mxu0 0.0
    %156 = vmatpush1.msra.mxu0 0.0
    %157 = vmatprep.subr.mxu0 0.0
    %158 = vmatpush1.msra.mxu0 0.0
    %159 = vmatprep.subr.mxu0 0.0
    %160 = vmatpush1.msra.mxu0 0.0
    %161 = vmatprep.subr.mxu0 0.0
    %162 = vmatpush1.msra.mxu0 0.0
    %163 = vmatprep.subr.mxu0 0.0
    %164 = vmatpush1.msra.mxu0 0.0
    %165 = vmatprep.subr.mxu0 0.0
    %166 = vmatpush1.msra.mxu0 0.0
    %167 = vmatprep.mubr.f32.mxu0 %v101
    %168 = vmatmul.mubr.f32.gmra.mrb[0].mxu0 %v41
    %v169 = vpop.f32.mrb[0].mxu0
    %v170 = vadd.f32 %v92, %v169
    %v171 = vpop.f32.mrb[0].mxu0
    %v172 = vadd.f32 %v96, %v171
    %173 = vdwg.mxu0
    %vm174 = vcmask 64512
    %v175 = vsel %vm174, %v170, -inf
    %176 = vmax.xlane.f32.xlu0 %v175
    %v177 = vpop.xlane.xlu0 %176
    %v178 = vsub.f32 %v170, %v177
    %v179 = vmul.f32 %v178, 1.442695
    %v180 = vpow.pop %v179
    %v181 = vsel %vm174, %v180, 0.0
    %182 = vadd.xlane.f32.xlu0 %v181
    %v183 = vpop.xlane.xlu0 %182
    %v184 = vrcp.pop %v183
    %v185 = vmul.f32 %v180, %v184
    %187 = vset.pattern.permute.xlu0 0
    %188 = vperm.xlu0 %187, %v185
    %v189 = vpop.permute.xlu0 %188
    %v191 = vmul.f32 %v189, %v170
    %193 = vrot.lane.b32.xlu0 %v191, 96
    %v194 = vpop.permute.xlu0 %193
    %v196 = vadd.f32 %v170, %v194
    %197 = vset.pattern.permute.xlu0 1
    %198 = vperm.xlu0 %197, %v185
    %v199 = vpop.permute.xlu0 %198
    %v201 = vmul.f32 %v199, %v170
    %203 = vrot.lane.b32.xlu0 %v201, 64
    %v204 = vpop.permute.xlu0 %203
    %v206 = vadd.f32 %v196, %v204
    %207 = vset.pattern.permute.xlu0 2
    %208 = vperm.xlu0 %207, %v185
    %v209 = vpop.permute.xlu0 %208
    %v211 = vmul.f32 %v209, %v170
    %v212 = vmul.f32 %v209, %v172
    %215 = vrot.lane.b32.xlu0 %v211, 32
    %v216 = vpop.permute.xlu0 %215
    %217 = vrot.lane.b32.xlu0 %v212, 32
    %v218 = vpop.permute.xlu0 %217
    %vm219 = vcmask 261120
    %v220 = vsel %vm219, %v216, %v218
    %v222 = vadd.f32 %v206, %v220
    %223 = vset.pattern.permute.xlu0 3
    %224 = vperm.xlu0 %223, %v185
    %v225 = vpop.permute.xlu0 %224
    %v227 = vmul.f32 %v225, %v172
    %v228 = vadd.f32 %v222, %v227
    %229 = vset.pattern.permute.xlu0 4
    %230 = vperm.xlu0 %229, %v185
    %v231 = vpop.permute.xlu0 %230
    %v233 = vmul.f32 %v231, %v172
    %235 = vrot.lane.b32.xlu0 %v233, 96
    %v236 = vpop.permute.xlu0 %235
    %v238 = vadd.f32 %v228, %v236
    %v239 = vld [vmem:[%s3] sm:$0x1]
    %v241 = vlaneseq
    %v242 = vshrl.u32 %v241, 7
    %v243 = vsub.s32 0, %v242
    %v244 = vrot.slane %v239, %v243
    %245 = vrot.lane.b32.xlu0 %v244, 8
    %v246 = vpop.permute.xlu0 %245
    %v248 = vadd.f32 %v238, %v246
    %v249 = vmax.f32 %v248, 0.0
    %v250 = vld [vmem:[%s4] sm:$0xff]
    %v251 = vld [vmem:[%s4 + $0x8] sm:$0xff]
    %v252 = vld [vmem:[%s4 + $0x10] sm:$0xff]
    %v253 = vld [vmem:[%s4 + $0x18] sm:$0xff]
    %v254 = vld [vmem:[%s5] sm:$0x1]
    %v256 = vlaneseq
    %v257 = vshrl.u32 %v256, 7
    %v258 = vsub.s32 0, %v257
    %v259 = vrot.slane %v254, %v258
    %262 = vrot.lane.b32.xlu0 %v249, 120
    %v263 = vpop.permute.xlu0 %262
    %v264 = vsel %vm219, %v263, 0
    %266 = vmatprep.subr.mxu0 0.0
    %267 = vmatpush1.msra.mxu0 %v250
    %268 = vmatprep.subr.mxu0 0.0
    %269 = vmatpush1.msra.mxu0 %v251
    %270 = vmatprep.subr.mxu0 0.0
    %271 = vmatpush1.msra.mxu0 %v252
    %272 = vmatprep.subr.mxu0 0.0
    %273 = vmatpush1.msra.mxu0 %v253
    %274 = vmatprep.subr.mxu0 0.0
    %275 = vmatpush1.msra.mxu0 0.0
    %276 = vmatprep.subr.mxu0 0.0
    %277 = vmatpush1.msra.mxu0 0.0
    %278 = vmatprep.subr.mxu0 0.0
    %279 = vmatpush1.msra.mxu0 0.0
    %280 = vmatprep.subr.mxu0 0.0
    %281 = vmatpush1.msra.mxu0 0.0
    %282 = vmatprep.subr.mxu0 0.0
    %283 = vmatpush1.msra.mxu0 0.0
    %284 = vmatprep.subr.mxu0 0.0
    %285 = vmatpush1.msra.mxu0 0.0
    %286 = vmatprep.subr.mxu0 0.0
    %287 = vmatpush1.msra.mxu0 0.0
    %288 = vmatprep.subr.mxu0 0.0
    %289 = vmatpush1.msra.mxu0 0.0
    %290 = vmatprep.subr.mxu0 0.0
    %291 = vmatpush1.msra.mxu0 0.0
    %292 = vmatprep.subr.mxu0 0.0
    %293 = vmatpush1.msra.mxu0 0.0
    %294 = vmatprep.subr.mxu0 0.0
    %295 = vmatpush1.msra.mxu0 0.0
    %296 = vmatprep.subr.mxu0 0.0
    %297 = vmatpush1.msra.mxu0 0.0
    %298 = vmatprep.subr.mxu0 0.0
    %299 = vmatpush1.msra.mxu0 0.0
    %300 = vmatprep.subr.mxu0 0.0
    %301 = vmatpush1.msra.mxu0 0.0
    %302 = vmatprep.subr.mxu0 0.0
    %303 = vmatpush1.msra.mxu0 0.0
    %304 = vmatprep.subr.mxu0 0.0
    %305 = vmatpush1.msra.mxu0 0.0
    %306 = vmatprep.subr.mxu0 0.0
    %307 = vmatpush1.msra.mxu0 0.0
    %308 = vmatprep.subr.mxu0 0.0
    %309 = vmatpush1.msra.mxu0 0.0
    %310 = vmatprep.subr.mxu0 0.0
    %311 = vmatpush1.msra.mxu0 0.0
    %312 = vmatprep.subr.mxu0 0.0
    %313 = vmatpush1.msra.mxu0 0.0
    %314 = vmatprep.subr.mxu0 0.0
    %315 = vmatpush1.msra.mxu0 0.0
    %316 = vmatprep.subr.mxu0 0.0
    %317 = vmatpush1.msra.mxu0 0.0
    %318 = vmatprep.subr.mxu0 0.0
    %319 = vmatpush1.msra.mxu0 0.0
    %320 = vmatprep.subr.mxu0 0.0
    %321 = vmatpush1.msra.mxu0 0.0
    %322 = vmatprep.subr.mxu0 0.0
    %323 = vmatpush1.msra.mxu0 0.0
    %324 = vmatprep.subr.mxu0 0.0
    %325 = vmatpush1.msra.mxu0 0.0
    %326 = vmatprep.subr.mxu0 0.0
    %327 = vmatpush1.msra.mxu0 0.0
    %328 = vmatprep.subr.mxu0 0.0
    %329 = vmatpush1.msra.mxu0 0.0
    %330 = vmatprep.mubr.f32.mxu0 0.0
    %331 = vmatmul.mubr.f32.gmra.mrb[0].mxu0 %v264
    %v332 = vpop.f32.mrb[0].mxu0
    %v333 = vadd.f32 %v259, %v332
    %v334 = vpop.f32.mrb[0].mxu0
    %335 = vdwg.mxu0
    %336 = vst.msk [vmem:[#allocation5] sm:$0xff] %vm174, %v333
    %vm337 = vcmask 39936
    %338 = vst.msk [vmem:[#allocation6] sm:$0xff] %vm337, %v185
    // Predicated region
    $region30: #{alw_att_net_forward.1} parent=1 // pred_check
      _
    $region31: #{alw_att_net_forward.1} parent=1 // pred_check_branch
      %340 = sbr.rel (0) target = $region33
    $region32: #{alw_att_net_forward.1} parent=1 // pred_region
      %s342 = ssub.s32 128, 128
      %343 = vsyncadd [#allocation4], %s342
      %s345 = sshll.u32 [#allocation5], 4
      %s346 = int_to_ptr.vmem [resolvable:$true] %s345
      %348 = dma.vmem_to_hbm [thread:$0]  %s346, 128, %s6, [#allocation4]
    $region33: #{alw_att_net_forward.1} parent=1 // pred_fallthru
      _
    // Predicated region
    $region34: #{alw_att_net_forward.1} parent=1 // pred_check
      _
    $region35: #{alw_att_net_forward.1} parent=1 // pred_check_branch
      %350 = sbr.rel (0) target = $region37
    $region36: #{alw_att_net_forward.1} parent=1 // pred_region
      %s352 = ssub.s32 128, 128
      %353 = vsyncadd [#allocation7], %s352
      %s355 = sshll.u32 [#allocation6], 4
      %s356 = int_to_ptr.vmem [resolvable:$true] %s355
      %358 = dma.vmem_to_hbm [thread:$0]  %s356, 128, %s7, [#allocation7]
    $region37: #{alw_att_net_forward.1} parent=1 // pred_fallthru
      _
    // Predicated region
    $region38: #{alw_att_net_forward.1} parent=1 // pred_check
      _
    $region39: #{alw_att_net_forward.1} parent=1 // pred_check_branch
      %360 = sbr.rel (0) target = $region41
    $region40: #{alw_att_net_forward.1} parent=1 // pred_region
      %361 = dma.done [#allocation4], 128
    $region41: #{alw_att_net_forward.1} parent=1 // pred_fallthru
      _
    // Predicated region
    $region42: #{alw_att_net_forward.1} parent=1 // pred_check
      _
    $region43: #{alw_att_net_forward.1} parent=1 // pred_check_branch
      %363 = sbr.rel (0) target = $region45
    $region44: #{alw_att_net_forward.1} parent=1 // pred_region
      %364 = dma.done [#allocation7], 128
    $region45: #{alw_att_net_forward.1} parent=1 // pred_fallthru
      _
    %365 = vsyncpa [#allocation3], 1
    %366 = vsyncpa [#allocation4], 1
    %367 = vsyncpa [#allocation7], 1

</llo_original>
